<compile_context>
chip_gen: v6e
topology: v6e:2x2x1
jax: 0.10.0
libtpu: 0.0.40
codegen_flags: <defaults>
</compile_context>

<pallas_src>
import jax
import jax.numpy as jnp
from jax.experimental import pallas as pl
from jax.experimental.pallas import tpu as pltpu


def _make_kernel(flat, use_relu):
    """flat = C*D.  Output row tile = [act(x_tile), act(x_tile + 1)]."""
    def kernel(x_ref, o_ref):
        x = x_ref[...]                       # (TB, flat)
        if use_relu:
            a = jnp.maximum(x, 0.0)
            b = jnp.maximum(x + 1.0, 0.0)
        else:
            a = jnp.tanh(x)
            b = jnp.tanh(x + 1.0)
        # When flat % 128 == 0 both stores start on a vreg lane boundary
        # (unmasked, lane-dense).  For small/odd flat the second store is
        # masked, which only matters at toy sizes.
        o_ref[:, :flat] = a
        o_ref[:, flat:] = b
    return kernel


def _choose_row_tile(B, flat, dtype_bytes):
    """Pick a row tile so one grid step moves ~4 MiB (in + out), >=8 rows,
    sublane-aligned, and double-buffered well under every chip's scoped-VMEM
    default (v5e 16 MiB, v6e/v7x 32 MiB)."""
    target_bytes = 4 * 1024 * 1024
    per_row = 3 * flat * dtype_bytes         # flat read + 2*flat written
    tb = max(8, target_bytes // max(per_row, 1))
    if tb >= B:
        return B                              # single block covers all rows
    return max(8, (tb // 8) * 8)              # sublane (8) aligned tile


def model_forward(x):
    """x: (B, C, D)  ->  (B, 2*C*D), same dtype."""
    B, C, D = x.shape
    cat_shape = (B, 2 * C, D)
    # torch compares the un-viewed cat shape against (1, 3); statically False.
    use_relu = (cat_shape == (1, 3))

    flat = C * D
    x2 = x.reshape(B, flat)
    # TODO(synk): for production shapes where flat % 128 != 0, pad D (or flat)
    # to a multiple of 128 in the caller to keep the second-half store unmasked.

    tb = _choose_row_tile(B, flat, x.dtype.itemsize)
    grid = (pl.cdiv(B, tb),)

    out = pl.pallas_call(
        _make_kernel(flat, use_relu),
        out_shape=jax.ShapeDtypeStruct((B, 2 * flat), x.dtype),
        grid=grid,
        in_specs=[pl.BlockSpec((tb, flat), lambda i: (i, 0))],
        out_specs=pl.BlockSpec((tb, 2 * flat), lambda i: (i, 0)),
        compiler_params=pltpu.CompilerParams(
            dimension_semantics=("parallel",)),
    )(x2)
    return out


def _reference(x):
    B = x.shape[0]
    y = jnp.concatenate([x, x + 1.0], axis=1).reshape(B, -1)
    return jnp.tanh(y)


if __name__ == "__main__":
    key = jax.random.PRNGKey(0)

    # Shape from the torch script: x = torch.randn(2, 2, 2)
    x_small = jax.random.normal(key, (2, 2, 2), dtype=jnp.float32)
    out_small = jax.block_until_ready(model_forward(x_small))
    ref_small = _reference(x_small)
    assert out_small.shape == ref_small.shape, (out_small.shape, ref_small.shape)
    assert jnp.allclose(out_small, ref_small, atol=1e-6), "mismatch (small)"

    # A lane-aligned shape (flat = 4*128 = 512) to exercise the tiled,
    # unmasked-store path as well.
    x_big = jax.random.normal(jax.random.PRNGKey(0), (64, 4, 128),
                              dtype=jnp.float32)
    out_big = jax.block_until_ready(model_forward(x_big))
    ref_big = _reference(x_big)
    assert out_big.shape == ref_big.shape, (out_big.shape, ref_big.shape)
    assert jnp.allclose(out_big, ref_big, atol=1e-6), "mismatch (aligned)"

    print("KERNEL_OK")
</pallas_src>

<mosaic_0001>
module attributes {stable_mosaic.version = 11 : i64} {
  func.func @kernel(%arg0: i32, %arg1: memref<2x4xf32, #tpu.memory_space<vmem>>, %arg2: memref<2x8xf32, #tpu.memory_space<vmem>>) attributes {dimension_semantics = [#tpu.dimension_semantics<parallel>], iteration_bounds = array<i64: 1>, scalar_prefetch = 0 : i64, scratch_operands = 0 : i64, tpu.core_type = #tpu.core_type<tc>, window_params = [{transform_indices = @transform_0, window_bounds = array<i64: 2, 4>}, {transform_indices = @transform_1, window_bounds = array<i64: 2, 8>}]} {
    %c0 = arith.constant 0 : index
    %c0_0 = arith.constant 0 : index
    %0 = vector.load %arg1[%c0, %c0_0] : memref<2x4xf32, #tpu.memory_space<vmem>>, vector<2x4xf32>
    %1 = math.tanh %0 : vector<2x4xf32>
    %cst = arith.constant 1.000000e+00 : f32
    %2 = vector.broadcast %cst : f32 to vector<2x4xf32>
    %3 = arith.addf %0, %2 : vector<2x4xf32>
    %4 = math.tanh %3 : vector<2x4xf32>
    %c0_1 = arith.constant 0 : index
    %c0_2 = arith.constant 0 : index
    %5 = vector.load %arg2[%c0_1, %c0_2] : memref<2x8xf32, #tpu.memory_space<vmem>>, vector<2x4xf32>
    tpu.vector_store %arg2[%c0_1, %c0_2], %1 {strides = array<i32>} : memref<2x8xf32, #tpu.memory_space<vmem>>, vector<2x4xf32>,
    %c0_3 = arith.constant 0 : index
    %c4 = arith.constant 4 : index
    %6 = vector.load %arg2[%c0_3, %c4] : memref<2x8xf32, #tpu.memory_space<vmem>>, vector<2x4xf32>
    tpu.vector_store %arg2[%c0_3, %c4], %4 {strides = array<i32>} : memref<2x8xf32, #tpu.memory_space<vmem>>, vector<2x4xf32>,
    return
  }
  func.func @transform_0(%arg0: i32) -> (i32, i32) {
    %c0_i32 = arith.constant 0 : i32
    %c0_i32_0 = arith.constant 0 : i32
    return %arg0, %c0_i32 : i32, i32
  }
  func.func @transform_1(%arg0: i32) -> (i32, i32) {
    %c0_i32 = arith.constant 0 : i32
    %c0_i32_0 = arith.constant 0 : i32
    return %arg0, %c0_i32 : i32, i32
  }
}

</mosaic_0001>

<llo_original>
// kernel: tpu_custom_call.1
$region0: #{tpu_custom_call.1}
  #allocation0 [shape = 'u32[]', space=smem, size = 0x4, offset = 0x4, fixed_abs, tag = 'smem constant byte address 0x4 - core index']
  #allocation1 [shape = 'u32[144,128]{1,0:T(1,128)}', space=vmem, size = 0x12000, scoped, tag = 'internal scratch']
  %s0 = inlined_call_operand.hbm [shape: f32[2,4], index: 0, kind: input, shape index: {}]
  %s1 = inlined_call_operand.hbm [shape: f32[2,8], index: 1, kind: output, shape index: {}]
  %s2 = sld [smem:[#allocation0]]
  $region18: #{tpu_custom_call.1} parent=0
    _
  %s4 = ssub.s32 1, %s2
  %s5 = scalar_select 0, %s4, %s2
  $region1: #{tpu_custom_call.1} parent=0
    #allocation2 [shape = 'u8[1024]{0}', space=vmem, size = 0x400, scoped, tag = 'input window, operand 0, single buffered']
    #allocation3 [shape = 's32[1]{0}', space=sflag, size = 0x4, scoped, tag = 'scoped memory for tpu_custom_call.1']
    #allocation4 [shape = 's32[1]{0}', space=sflag, size = 0x4, scoped, tag = 'scoped memory for tpu_custom_call.1']
    #allocation5 [shape = 'u8[1024]{0}', space=vmem, size = 0x400, scoped, tag = 'output window, operand 0, single buffered']
    %6 = vsyncpa [#allocation3], 0
    %7 = vsyncpa [#allocation4], 0
    // Predicated region
    $region2: #{tpu_custom_call.1} parent=1 // pred_check
      _
    $region3: #{tpu_custom_call.1} parent=1 // pred_check_branch
      %9 = sbr.rel (0) target = $region5
    $region4: #{tpu_custom_call.1} parent=1 // pred_region
      %s11 = ssub.s32 32, 32
      %12 = vsyncadd [#allocation3], %s11
      %s14 = sshll.u32 [#allocation2], 4
      %s15 = int_to_ptr.vmem [resolvable:$true] %s14
      %17 = dma.hbm_to_vmem [thread:$0]  %s0, 32, %s15, [#allocation3]
    $region5: #{tpu_custom_call.1} parent=1 // pred_fallthru
      _
    // Predicated region
    $region6: #{tpu_custom_call.1} parent=1 // pred_check
      _
    $region7: #{tpu_custom_call.1} parent=1 // pred_check_branch
      %19 = sbr.rel (0) target = $region9
    $region8: #{tpu_custom_call.1} parent=1 // pred_region
      %20 = dma.done [#allocation3], 32
    $region9: #{tpu_custom_call.1} parent=1 // pred_fallthru
      _
    %v21 = vld [vmem:[#allocation2] sm:$0x3]
    %v22 = vtanh.pop %v21
    %v23 = vadd.f32 %v21, 1.0
    %v24 = vtanh.pop %v23
    %vm25 = vcmask 25600
    %26 = vst.msk [vmem:[#allocation5] sm:$0x3] %vm25, %v22
    %28 = vrot.lane.b32.xlu0 %v24, 4
    %v29 = vpop.permute.xlu0 %28
    %vm31 = vcmask 58400
    %32 = vst.msk [vmem:[#allocation5] sm:$0x3] %vm31, %v29
    // Predicated region
    $region10: #{tpu_custom_call.1} parent=1 // pred_check
      _
    $region11: #{tpu_custom_call.1} parent=1 // pred_check_branch
      %34 = sbr.rel (0) target = $region13
    $region12: #{tpu_custom_call.1} parent=1 // pred_region
      %s36 = ssub.s32 32, 32
      %37 = vsyncadd [#allocation4], %s36
      %s39 = sshll.u32 [#allocation5], 4
      %s40 = int_to_ptr.vmem [resolvable:$true] %s39
      %42 = dma.vmem_to_hbm [thread:$0]  %s40, 32, %s1, [#allocation4]
    $region13: #{tpu_custom_call.1} parent=1 // pred_fallthru
      _
    // Predicated region
    $region14: #{tpu_custom_call.1} parent=1 // pred_check
      _
    $region15: #{tpu_custom_call.1} parent=1 // pred_check_branch
      %44 = sbr.rel (0) target = $region17
    $region16: #{tpu_custom_call.1} parent=1 // pred_region
      %45 = dma.done [#allocation4], 32
    $region17: #{tpu_custom_call.1} parent=1 // pred_fallthru
      _
    %46 = vsyncpa [#allocation3], 1
    %47 = vsyncpa [#allocation4], 1

</llo_original>
